<compile_context>
chip_gen: v7x
topology: tpu7x:2x2x1
jax: 0.10.0
libtpu: 0.0.40
codegen_flags: <defaults>
</compile_context>

<pallas_src>
import functools

import numpy as np
import jax
import jax.numpy as jnp
from jax.experimental import pallas as pl
from jax.experimental.pallas import tpu as pltpu

_PI = 3.14159265358979323846
_PI_2 = _PI * 0.5
_PI_4 = _PI * 0.25
_TAN_3PI_8 = 2.414213562373095
_TAN_PI_8 = 0.41421356237309503

_VMEM_LIMIT = 48 * 1024 * 1024


# -----------------------------------------------------------------------------
# In-kernel atan2 (torch.angle semantics); divides -> approx reciprocal (EUP).
# -----------------------------------------------------------------------------
def _atan_abs(ax):
    """arctan for ax >= 0, float32: Cephes-style range reduction + poly."""
    big = ax > _TAN_3PI_8
    mid = ax > _TAN_PI_8
    safe = jnp.maximum(ax, 1e-30)                     # avoid 0-div in dead lanes
    inv_safe = pl.reciprocal(safe, approx=True)       # EUP slot, ~free
    inv_p1 = pl.reciprocal(ax + 1.0, approx=True)
    z = jnp.where(big, -inv_safe,
                  jnp.where(mid, (ax - 1.0) * inv_p1, ax))
    offs = jnp.where(big, _PI_2, jnp.where(mid, _PI_4, 0.0))
    zz = z * z
    p = ((((8.05374449538e-2 * zz - 1.38776856032e-1) * zz
           + 1.99777106478e-1) * zz - 3.33329491539e-1) * zz * z + z)
    return offs + p


def _atan2(y, x):
    """atan2(y, x) with torch.angle quadrant/zero handling."""
    safe_x = jnp.where(x == 0.0, 1.0, x)
    r = y * pl.reciprocal(safe_x, approx=True)
    a = _atan_abs(jnp.abs(r))
    base = jnp.where(r >= 0.0, a, -a)
    return jnp.where(
        x > 0.0, base,
        jnp.where(
            x < 0.0,
            jnp.where(y >= 0.0, base + _PI, base - _PI),
            jnp.where(y > 0.0, _PI_2, jnp.where(y < 0.0, -_PI_2, 0.0))))


# -----------------------------------------------------------------------------
# Kernel A (standalone / validation): batched 2-D DFT + amplitude + phase.
# Single fused matmul against the packed [kr | ki] matrix, N = 2*HW.
# -----------------------------------------------------------------------------
def dft_amp_phase_kernel(x_ref, kp_ref, amp_ref, ph_ref):
    hw = amp_ref.shape[-1]
    y = jnp.dot(x_ref[...], kp_ref[...], preferred_element_type=jnp.float32)
    yr = y[:, :hw]                                    # lane slice at 128 boundary
    yi = y[:, hw:]
    amp_ref[...] = jnp.sqrt(yr * yr + yi * yi)
    ph_ref[...] = _atan2(yi, yr)


# -----------------------------------------------------------------------------
# Kernel B (fused forward): per channel-tile DFT -> amp/phase -> first-layer
# partial sums into a (tb, Hd) VMEM accumulator; LeakyReLU + Hd->1 VPU
# reduction on the last channel step.  amp/phase never touch HBM.
# -----------------------------------------------------------------------------
def freq_disc_kernel(x_ref, kp_ref, w1a_ref, w1p_ref, b1_ref, w2_ref, b2_ref,
                     o_ref, acc_ref):
    c = pl.program_id(1)

    @pl.when(c == 0)
    def _():
        acc_ref[...] = jnp.zeros_like(acc_ref)

    hw = w1a_ref.shape[0]
    x = x_ref[0]                                      # (tb, HW) bf16
    y = jnp.dot(x, kp_ref[...], preferred_element_type=jnp.float32)   # (tb, 2HW)
    yr = y[:, :hw]
    yi = y[:, hw:]
    amp = jnp.sqrt(yr * yr + yi * yi)
    ph = _atan2(yi, yr)

    acc_ref[...] += (
        jnp.dot(amp.astype(w1a_ref.dtype), w1a_ref[...],
                preferred_element_type=jnp.float32)
        + jnp.dot(ph.astype(w1p_ref.dtype), w1p_ref[...],
                  preferred_element_type=jnp.float32))

    @pl.when(c == pl.num_programs(1) - 1)
    def _():
        h = acc_ref[...] + b1_ref[...]
        h = jnp.where(h > 0, h, 0.2 * h)              # LeakyReLU(0.2)
        # Hd -> 1 projection as VPU multiply + lane reduction (no N=1 matmul).
        o_ref[...] = jnp.sum(h * w2_ref[...], axis=-1, keepdims=True) + b2_ref[...]


# -----------------------------------------------------------------------------
# Host-side glue: memoized packed DFT matrix, tiling helpers, wrappers, params.
# -----------------------------------------------------------------------------
@functools.lru_cache(maxsize=None)
def _packed_dft_bf16(h, w):
    """Packed [Re | Im] ortho-normalized Kronecker 2-D DFT matrix, bf16."""
    def dft(n):
        k = np.arange(n, dtype=np.float64)
        ang = (-2.0 * np.pi / n) * np.outer(k, k)
        s = 1.0 / np.sqrt(float(n))
        return np.cos(ang) * s, np.sin(ang) * s
    fhr, fhi = dft(h)
    fwr, fwi = dft(w)
    kr = np.kron(fhr, fwr) - np.kron(fhi, fwi)
    ki = np.kron(fhr, fwi) + np.kron(fhi, fwr)
    kp = np.concatenate([kr, ki], axis=1).astype(np.float32)   # (HW, 2*HW)
    return jnp.asarray(kp, dtype=jnp.bfloat16)


def _pick_tile(n, candidates=(256, 128, 64, 32, 16, 8)):
    """Largest MXU-friendly row tile that divides n (falls back to n)."""
    for cand in candidates:
        if n % cand == 0:
            return cand
    return n


def frequency_transform_pallas(x):
    """x: (B, C, H, W) -> (amp, phase), each (B*C, H*W) lane-dense float32."""
    b, c, h, w = x.shape
    bc, hw = b * c, h * w
    kp = _packed_dft_bf16(h, w)
    x_flat = x.reshape(bc, hw).astype(jnp.bfloat16)   # bf16 MXU operand

    tb = _pick_tile(bc)
    grid = (bc // tb,)                                # batch tiles: parallel axis

    amp2d, ph2d = pl.pallas_call(
        dft_amp_phase_kernel,
        out_shape=(jax.ShapeDtypeStruct((bc, hw), jnp.float32),
                   jax.ShapeDtypeStruct((bc, hw), jnp.float32)),
        grid=grid,
        in_specs=[pl.BlockSpec((tb, hw), lambda i: (i, 0)),
                  pl.BlockSpec((hw, 2 * hw), lambda i: (0, 0))],
        out_specs=(pl.BlockSpec((tb, hw), lambda i: (i, 0)),
                   pl.BlockSpec((tb, hw), lambda i: (i, 0))),
        compiler_params=pltpu.CompilerParams(
            dimension_semantics=("parallel",),
            vmem_limit_bytes=_VMEM_LIMIT),
    )(x_flat, kp)
    return amp2d, ph2d


def frequency_transform(x):
    """PyTorch-shaped (B, C, H, W) amp/phase (for checks / API parity)."""
    b, c, h, w = x.shape
    amp2d, ph2d = frequency_transform_pallas(x)
    return amp2d.reshape(b, c, h, w), ph2d.reshape(b, c, h, w)


def init_params(c, h, w, hidden, key):
    # TODO(synk): model_spec is external config in the original repo; use a
    # deterministic 2-layer MLP discriminator of matching input width.
    chw = c * h * w
    d = 2 * chw
    k1, k2 = jax.random.split(key)
    w1 = jax.random.normal(k1, (d, hidden), jnp.float32) / jnp.sqrt(jnp.float32(d))
    b1 = jnp.zeros((1, hidden), jnp.float32)
    w2 = jax.random.normal(k2, (1, hidden), jnp.float32) / jnp.sqrt(jnp.float32(hidden))
    b2 = jnp.zeros((1, 1), jnp.float32)
    # Split w1 so the head reads amp / phase directly (concat never built).
    return w1[:chw], w1[chw:], b1, w2, b2


def frequency_discriminator(x, params):
    """Fully fused forward: DFT + amp/phase + MLP head in ONE pallas_call."""
    b, c, h, w = x.shape
    hw = h * w
    w1a, w1p, b1, w2, b2 = params
    hd = w1a.shape[1]

    kp = _packed_dft_bf16(h, w)
    # (C, B, HW) layout: channel is a leading size-1 block dim, so the last
    # two block dims stay (tb, HW) and satisfy the (8,128)/full-dim rule.
    x_cbf = jnp.transpose(x, (1, 0, 2, 3)).reshape(c, b, hw).astype(jnp.bfloat16)
    w1a_bf = w1a.astype(jnp.bfloat16)
    w1p_bf = w1p.astype(jnp.bfloat16)

    tb = _pick_tile(b)
    grid = (b // tb, c)      # (parallel batch tiles, arbitrary channel reduction)

    out = pl.pallas_call(
        freq_disc_kernel,
        out_shape=jax.ShapeDtypeStruct((b, 1), jnp.float32),
        grid=grid,
        in_specs=[
            pl.BlockSpec((1, tb, hw), lambda i, cc: (cc, i, 0)),   # x channel slab
            pl.BlockSpec((hw, 2 * hw), lambda i, cc: (0, 0)),      # packed DFT
            pl.BlockSpec((hw, hd), lambda i, cc: (cc, 0)),         # w1 (amp rows)
            pl.BlockSpec((hw, hd), lambda i, cc: (cc, 0)),         # w1 (phase rows)
            pl.BlockSpec((1, hd), lambda i, cc: (0, 0)),           # b1
            pl.BlockSpec((1, hd), lambda i, cc: (0, 0)),           # w2 row
            pl.BlockSpec((1, 1), lambda i, cc: (0, 0)),            # b2
        ],
        out_specs=pl.BlockSpec((tb, 1), lambda i, cc: (i, 0)),
        scratch_shapes=[pltpu.VMEM((tb, hd), jnp.float32)],
        compiler_params=pltpu.CompilerParams(
            dimension_semantics=("parallel", "arbitrary"),
            vmem_limit_bytes=_VMEM_LIMIT),
    )(x_cbf, kp, w1a_bf, w1p_bf, b1, w2, b2)
    return out


def _discriminator_ref(x, params):
    """Pure-JAX f32 reference of the whole forward (fft2 + MLP head)."""
    w1a, w1p, b1, w2, b2 = params
    f = jnp.fft.fft2(x.astype(jnp.float32), norm="ortho")
    amp = jnp.abs(f)
    ph = jnp.angle(f)
    b = x.shape[0]
    h = amp.reshape(b, -1) @ w1a + ph.reshape(b, -1) @ w1p + b1
    h = jnp.where(h > 0, h, 0.2 * h)
    return h @ w2.T + b2


if __name__ == "__main__":
    B, C, H, W = 2, 4, 16, 16
    HIDDEN = 128
    key = jax.random.PRNGKey(0)
    kx, kparam = jax.random.split(key)
    x = jax.random.normal(kx, (B, C, H, W), dtype=jnp.float32)
    params = init_params(C, H, W, hidden=HIDDEN, key=kparam)

    # Check 1: in-kernel DFT + amp/phase vs jnp.fft.fft2 (ortho).  Tolerances
    # widened vs the f32 version to cover bf16 MXU operands (K = H*W = 256).
    amp, phase = frequency_transform(x)
    ref = jnp.fft.fft2(x, norm="ortho")
    ok = (bool(jnp.allclose(amp, jnp.abs(ref), atol=5e-2, rtol=2e-2))
          and bool(jnp.allclose(amp * jnp.cos(phase), ref.real, atol=5e-2, rtol=2e-2))
          and bool(jnp.allclose(amp * jnp.sin(phase), ref.imag, atol=5e-2, rtol=2e-2)))
    if not ok:
        raise AssertionError("frequency_transform mismatch vs jnp.fft.fft2")

    # Check 2: fused discriminator vs pure-JAX f32 reference (loose atol for
    # bf16 feature/weight quantization through the 2*C*H*W-wide first layer).
    out = frequency_discriminator(x, params)
    jax.block_until_ready(out)
    assert out.shape == (B, 1)
    ref_out = _discriminator_ref(x, params)
    if not bool(jnp.allclose(out, ref_out, atol=1.5e-1)):
        raise AssertionError("discriminator output mismatch vs JAX reference")

    print("KERNEL_OK")
</pallas_src>

<mosaic_0001>
module attributes {stable_mosaic.version = 11 : i64} {
  func.func @dft_amp_phase_kernel(%arg0: i32, %arg1: memref<8x256xbf16, #tpu.memory_space<vmem>>, %arg2: memref<256x512xbf16, #tpu.memory_space<vmem>>, %arg3: memref<8x256xf32, #tpu.memory_space<vmem>>, %arg4: memref<8x256xf32, #tpu.memory_space<vmem>>) attributes {dimension_semantics = [#tpu.dimension_semantics<parallel>], iteration_bounds = array<i64: 1>, scalar_prefetch = 0 : i64, scratch_operands = 0 : i64, tpu.core_type = #tpu.core_type<tc>, window_params = [{transform_indices = @transform_0, window_bounds = array<i64: 8, 256>}, {pipeline_mode = #tpu.pipeline_mode<synchronous>, transform_indices = @transform_1, window_bounds = array<i64: 256, 512>}, {transform_indices = @transform_2, window_bounds = array<i64: 8, 256>}, {transform_indices = @transform_3, window_bounds = array<i64: 8, 256>}]} {
    %c0 = arith.constant 0 : index
    %c0_0 = arith.constant 0 : index
    %0 = vector.load %arg1[%c0, %c0_0] : memref<8x256xbf16, #tpu.memory_space<vmem>>, vector<8x256xbf16>
    %c0_1 = arith.constant 0 : index
    %c0_2 = arith.constant 0 : index
    %1 = vector.load %arg2[%c0_1, %c0_2] : memref<256x512xbf16, #tpu.memory_space<vmem>>, vector<256x512xbf16>
    %cst = arith.constant dense<0.000000e+00> : vector<8x512xf32>
    %2 = tpu.matmul %0, %1, %cst {dimension_numbers = #tpu.dot_dimension_numbers<[1], [0], [0], [1], [0, 0, 1, 1], [], []>} : vector<8x256xbf16>, vector<256x512xbf16>, vector<8x512xf32> -> vector<8x512xf32>
    %3 = vector.extract_strided_slice %2 {offsets = [0, 0], sizes = [8, 256], strides = [1, 1]} : vector<8x512xf32> to vector<8x256xf32>
    %4 = vector.extract_strided_slice %2 {offsets = [0, 256], sizes = [8, 256], strides = [1, 1]} : vector<8x512xf32> to vector<8x256xf32>
    %5 = arith.mulf %3, %3 : vector<8x256xf32>
    %6 = arith.mulf %4, %4 : vector<8x256xf32>
    %7 = arith.addf %5, %6 : vector<8x256xf32>
    %8 = math.sqrt %7 : vector<8x256xf32>
    %c0_3 = arith.constant 0 : index
    %c0_4 = arith.constant 0 : index
    %9 = vector.load %arg3[%c0_3, %c0_4] : memref<8x256xf32, #tpu.memory_space<vmem>>, vector<8x256xf32>
    tpu.vector_store %arg3[%c0_3, %c0_4], %8 {strides = array<i32>} : memref<8x256xf32, #tpu.memory_space<vmem>>, vector<8x256xf32>,
    %cst_5 = arith.constant 0.000000e+00 : f32
    %10 = vector.broadcast %cst_5 : f32 to vector<8x256xf32>
    %11 = arith.cmpf oeq, %3, %10 : vector<8x256xf32>
    %cst_6 = arith.constant 1.000000e+00 : f32
    %12 = vector.broadcast %cst_6 : f32 to vector<8x256xf32>
    %13 = arith.select %11, %12, %3 : vector<8x256xi1>, vector<8x256xf32>
    %14 = tpu.reciprocal %13 {approx = true} : vector<8x256xf32> -> vector<8x256xf32>
    %15 = arith.mulf %4, %14 : vector<8x256xf32>
    %16 = math.absf %15 : vector<8x256xf32>
    %cst_7 = arith.constant 2.41421366 : f32
    %17 = vector.broadcast %cst_7 : f32 to vector<8x256xf32>
    %18 = arith.cmpf ogt, %16, %17 : vector<8x256xf32>
    %cst_8 = arith.constant 0.414213568 : f32
    %19 = vector.broadcast %cst_8 : f32 to vector<8x256xf32>
    %20 = arith.cmpf ogt, %16, %19 : vector<8x256xf32>
    %cst_9 = arith.constant 1.000000e-30 : f32
    %21 = vector.broadcast %cst_9 : f32 to vector<8x256xf32>
    %22 = arith.maximumf %16, %21 : vector<8x256xf32>
    %23 = tpu.reciprocal %22 {approx = true} : vector<8x256xf32> -> vector<8x256xf32>
    %cst_10 = arith.constant 1.000000e+00 : f32
    %24 = vector.broadcast %cst_10 : f32 to vector<8x256xf32>
    %25 = arith.addf %16, %24 : vector<8x256xf32>
    %26 = tpu.reciprocal %25 {approx = true} : vector<8x256xf32> -> vector<8x256xf32>
    %cst_11 = arith.constant 0.000000e+00 : f32
    %27 = vector.broadcast %cst_11 : f32 to vector<8x256xf32>
    %28 = arith.subf %27, %23 : vector<8x256xf32>
    %cst_12 = arith.constant 1.000000e+00 : f32
    %29 = vector.broadcast %cst_12 : f32 to vector<8x256xf32>
    %30 = arith.subf %16, %29 : vector<8x256xf32>
    %31 = arith.mulf %30, %26 : vector<8x256xf32>
    %32 = arith.select %20, %31, %16 : vector<8x256xi1>, vector<8x256xf32>
    %33 = arith.select %18, %28, %32 : vector<8x256xi1>, vector<8x256xf32>
    %cst_13 = arith.constant 0.785398185 : f32
    %cst_14 = arith.constant 0.000000e+00 : f32
    %34 = vector.broadcast %cst_13 : f32 to vector<8x256xf32>
    %35 = vector.broadcast %cst_14 : f32 to vector<8x256xf32>
    %36 = arith.select %20, %34, %35 : vector<8x256xi1>, vector<8x256xf32>
    %cst_15 = arith.constant 1.57079637 : f32
    %37 = vector.broadcast %cst_15 : f32 to vector<8x256xf32>
    %38 = arith.select %18, %37, %36 : vector<8x256xi1>, vector<8x256xf32>
    %39 = arith.mulf %33, %33 : vector<8x256xf32>
    %cst_16 = arith.constant 0.0805374458 : f32
    %40 = vector.broadcast %cst_16 : f32 to vector<8x256xf32>
    %41 = arith.mulf %40, %39 : vector<8x256xf32>
    %cst_17 = arith.constant 0.138776854 : f32
    %42 = vector.broadcast %cst_17 : f32 to vector<8x256xf32>
    %43 = arith.subf %41, %42 : vector<8x256xf32>
    %44 = arith.mulf %43, %39 : vector<8x256xf32>
    %cst_18 = arith.constant 0.199777111 : f32
    %45 = vector.broadcast %cst_18 : f32 to vector<8x256xf32>
    %46 = arith.addf %44, %45 : vector<8x256xf32>
    %47 = arith.mulf %46, %39 : vector<8x256xf32>
    %cst_19 = arith.constant 0.333329499 : f32
    %48 = vector.broadcast %cst_19 : f32 to vector<8x256xf32>
    %49 = arith.subf %47, %48 : vector<8x256xf32>
    %50 = arith.mulf %49, %39 : vector<8x256xf32>
    %51 = arith.mulf %50, %33 : vector<8x256xf32>
    %52 = arith.addf %51, %33 : vector<8x256xf32>
    %53 = arith.addf %38, %52 : vector<8x256xf32>
    %cst_20 = arith.constant 0.000000e+00 : f32
    %54 = vector.broadcast %cst_20 : f32 to vector<8x256xf32>
    %55 = arith.cmpf oge, %15, %54 : vector<8x256xf32>
    %cst_21 = arith.constant 0.000000e+00 : f32
    %56 = vector.broadcast %cst_21 : f32 to vector<8x256xf32>
    %57 = arith.subf %56, %53 : vector<8x256xf32>
    %58 = arith.select %55, %53, %57 : vector<8x256xi1>, vector<8x256xf32>
    %cst_22 = arith.constant 0.000000e+00 : f32
    %59 = vector.broadcast %cst_22 : f32 to vector<8x256xf32>
    %60 = arith.cmpf ogt, %3, %59 : vector<8x256xf32>
    %cst_23 = arith.constant 0.000000e+00 : f32
    %61 = vector.broadcast %cst_23 : f32 to vector<8x256xf32>
    %62 = arith.cmpf olt, %3, %61 : vector<8x256xf32>
    %cst_24 = arith.constant 0.000000e+00 : f32
    %63 = vector.broadcast %cst_24 : f32 to vector<8x256xf32>
    %64 = arith.cmpf oge, %4, %63 : vector<8x256xf32>
    %cst_25 = arith.constant 3.14159274 : f32
    %65 = vector.broadcast %cst_25 : f32 to vector<8x256xf32>
    %66 = arith.addf %58, %65 : vector<8x256xf32>
    %cst_26 = arith.constant 3.14159274 : f32
    %67 = vector.broadcast %cst_26 : f32 to vector<8x256xf32>
    %68 = arith.subf %58, %67 : vector<8x256xf32>
    %69 = arith.select %64, %66, %68 : vector<8x256xi1>, vector<8x256xf32>
    %cst_27 = arith.constant 0.000000e+00 : f32
    %70 = vector.broadcast %cst_27 : f32 to vector<8x256xf32>
    %71 = arith.cmpf ogt, %4, %70 : vector<8x256xf32>
    %cst_28 = arith.constant 0.000000e+00 : f32
    %72 = vector.broadcast %cst_28 : f32 to vector<8x256xf32>
    %73 = arith.cmpf olt, %4, %72 : vector<8x256xf32>
    %cst_29 = arith.constant -1.57079637 : f32
    %cst_30 = arith.constant 0.000000e+00 : f32
    %74 = vector.broadcast %cst_29 : f32 to vector<8x256xf32>
    %75 = vector.broadcast %cst_30 : f32 to vector<8x256xf32>
    %76 = arith.select %73, %74, %75 : vector<8x256xi1>, vector<8x256xf32>
    %cst_31 = arith.constant 1.57079637 : f32
    %77 = vector.broadcast %cst_31 : f32 to vector<8x256xf32>
    %78 = arith.select %71, %77, %76 : vector<8x256xi1>, vector<8x256xf32>
    %79 = arith.select %62, %69, %78 : vector<8x256xi1>, vector<8x256xf32>
    %80 = arith.select %60, %58, %79 : vector<8x256xi1>, vector<8x256xf32>
    %c0_32 = arith.constant 0 : index
    %c0_33 = arith.constant 0 : index
    %81 = vector.load %arg4[%c0_32, %c0_33] : memref<8x256xf32, #tpu.memory_space<vmem>>, vector<8x256xf32>
    tpu.vector_store %arg4[%c0_32, %c0_33], %80 {strides = array<i32>} : memref<8x256xf32, #tpu.memory_space<vmem>>, vector<8x256xf32>,
    return
  }
  func.func @transform_0(%arg0: i32) -> (i32, i32) {
    %c0_i32 = arith.constant 0 : i32
    %c0_i32_0 = arith.constant 0 : i32
    return %arg0, %c0_i32 : i32, i32
  }
  func.func @transform_1(%arg0: i32) -> (i32, i32) {
    %c0_i32 = arith.constant 0 : i32
    %c0_i32_0 = arith.constant 0 : i32
    %c0_i32_1 = arith.constant 0 : i32
    return %c0_i32, %c0_i32_0 : i32, i32
  }
  func.func @transform_2(%arg0: i32) -> (i32, i32) {
    %c0_i32 = arith.constant 0 : i32
    %c0_i32_0 = arith.constant 0 : i32
    return %arg0, %c0_i32 : i32, i32
  }
  func.func @transform_3(%arg0: i32) -> (i32, i32) {
    %c0_i32 = arith.constant 0 : i32
    %c0_i32_0 = arith.constant 0 : i32
    return %arg0, %c0_i32 : i32, i32
  }
}

</mosaic_0001>

<llo_original>
// kernel: tpu_custom_call.1
$region0: #{tpu_custom_call.1}
  #allocation0 [shape = 'u32[]', space=smem, size = 0x4, offset = 0x4, fixed_abs, tag = 'smem constant byte address 0x4 - core index']
  #allocation1 [shape = 'u32[144,128]{1,0:T(1,128)}', space=vmem, size = 0x12000, scoped, tag = 'internal scratch']
  %s0 = inlined_call_operand.hbm [shape: bf16[8,256], index: 0, kind: input, shape index: {}]
  %s1 = inlined_call_operand.hbm [shape: bf16[256,512], index: 1, kind: input, shape index: {}]
  %s2 = inlined_call_operand.hbm [shape: f32[8,256], index: 2, kind: output, shape index: {0}]
  %s3 = inlined_call_operand.hbm [shape: f32[8,256], index: 3, kind: output, shape index: {1}]
  %4 = xla_tuple %s2, %s3
  %s5 = sld [smem:[#allocation0]]
  $region34: #{tpu_custom_call.1} parent=0
    _
  %s7 = ssub.s32 1, %s5
  %s8 = scalar_select 0, %s7, %s5
  $region1: #{tpu_custom_call.1} parent=0
    #allocation2 [shape = 'u8[4096]{0}', space=vmem, size = 0x1000, scoped, tag = 'input window, operand 0, single buffered']
    #allocation3 [shape = 's32[1]{0}', space=sflag, size = 0x4, scoped, tag = 'scoped memory for tpu_custom_call.1']
    #allocation4 [shape = 's32[1]{0}', space=sflag, size = 0x4, scoped, tag = 'scoped memory for tpu_custom_call.1']
    #allocation5 [shape = 'u8[262144]{0}', space=vmem, size = 0x40000, scoped, tag = 'input window, operand 1, single buffered']
    #allocation6 [shape = 's32[1]{0}', space=sflag, size = 0x4, scoped, tag = 'scoped memory for tpu_custom_call.1']
    #allocation7 [shape = 'u8[8192]{0}', space=vmem, size = 0x2000, scoped, tag = 'output window, operand 0, single buffered']
    #allocation8 [shape = 'u8[8192]{0}', space=vmem, size = 0x2000, scoped, tag = 'output window, operand 1, single buffered']
    #allocation9 [shape = 's32[1]{0}', space=sflag, size = 0x4, scoped, tag = 'scoped memory for tpu_custom_call.1']
    %9 = vsyncpa [#allocation3], 0
    %10 = vsyncpa [#allocation6], 0
    %11 = vsyncpa [#allocation4], 0
    %12 = vsyncpa [#allocation9], 0
    // Predicated region
    $region2: #{tpu_custom_call.1} parent=1 // pred_check
      _
    $region3: #{tpu_custom_call.1} parent=1 // pred_check_branch
      %14 = sbr.rel (0) target = $region5
    $region4: #{tpu_custom_call.1} parent=1 // pred_region
      %s16 = ssub.s32 128, 128
      %17 = vsyncadd [#allocation3], %s16
      %s19 = sshll.u32 [#allocation2], 4
      %s20 = int_to_ptr.vmem [resolvable:$true] %s19
      %22 = dma.hbm_to_vmem [thread:$0]  %s0, 128, %s20, [#allocation3]
    $region5: #{tpu_custom_call.1} parent=1 // pred_fallthru
      _
    // Predicated region
    $region6: #{tpu_custom_call.1} parent=1 // pred_check
      _
    $region7: #{tpu_custom_call.1} parent=1 // pred_check_branch
      %24 = sbr.rel (0) target = $region9
    $region8: #{tpu_custom_call.1} parent=1 // pred_region
      %s26 = ssub.s32 8192, 8192
      %27 = vsyncadd [#allocation6], %s26
      %s28 = sshll.u32 [#allocation5], 4
      %s29 = int_to_ptr.vmem [resolvable:$true] %s28
      %34 = dma.hbm_to_vmem [thread:$0]  %s1, 8192, %s29, [#allocation6], 256, 256, 16
    $region9: #{tpu_custom_call.1} parent=1 // pred_fallthru
      _
    // Predicated region
    $region10: #{tpu_custom_call.1} parent=1 // pred_check
      _
    $region11: #{tpu_custom_call.1} parent=1 // pred_check_branch
      %36 = sbr.rel (0) target = $region13
    $region12: #{tpu_custom_call.1} parent=1 // pred_region
      %37 = dma.done [#allocation3], 128
    $region13: #{tpu_custom_call.1} parent=1 // pred_fallthru
      _
    // Predicated region
    $region14: #{tpu_custom_call.1} parent=1 // pred_check
      _
    $region15: #{tpu_custom_call.1} parent=1 // pred_check_branch
      %39 = sbr.rel (0) target = $region17
    $region16: #{tpu_custom_call.1} parent=1 // pred_region
      %40 = dma.done [#allocation6], 8192
    $region17: #{tpu_custom_call.1} parent=1 // pred_fallthru
      _
    %v41 = vld [vmem:[#allocation2] sm:$0xff]
    %v42 = vld [vmem:[#allocation5] sm:$0xff]
    %v43 = vld [vmem:[#allocation5 + $0x8] sm:$0xff]
    %v44 = vld [vmem:[#allocation5 + $0x10] sm:$0xff]
    %v45 = vld [vmem:[#allocation5 + $0x18] sm:$0xff]
    %v46 = vld [vmem:[#allocation5 + $0x20] sm:$0xff]
    %v47 = vld [vmem:[#allocation5 + $0x28] sm:$0xff]
    %v48 = vld [vmem:[#allocation5 + $0x30] sm:$0xff]
    %v49 = vld [vmem:[#allocation5 + $0x38] sm:$0xff]
    %v50 = vld [vmem:[#allocation5 + $0x40] sm:$0xff]
    %v51 = vld [vmem:[#allocation5 + $0x48] sm:$0xff]
    %v52 = vld [vmem:[#allocation5 + $0x50] sm:$0xff]
    %v53 = vld [vmem:[#allocation5 + $0x58] sm:$0xff]
    %v54 = vld [vmem:[#allocation5 + $0x60] sm:$0xff]
    %v55 = vld [vmem:[#allocation5 + $0x68] sm:$0xff]
    %v56 = vld [vmem:[#allocation5 + $0x70] sm:$0xff]
    %v57 = vld [vmem:[#allocation5 + $0x78] sm:$0xff]
    %v58 = vld [vmem:[#allocation5 + $0x80] sm:$0xff]
    %v59 = vld [vmem:[#allocation5 + $0x88] sm:$0xff]
    %v60 = vld [vmem:[#allocation5 + $0x90] sm:$0xff]
    %v61 = vld [vmem:[#allocation5 + $0x98] sm:$0xff]
    %v62 = vld [vmem:[#allocation5 + $0xa0] sm:$0xff]
    %v63 = vld [vmem:[#allocation5 + $0xa8] sm:$0xff]
    %v64 = vld [vmem:[#allocation5 + $0xb0] sm:$0xff]
    %v65 = vld [vmem:[#allocation5 + $0xb8] sm:$0xff]
    %v66 = vld [vmem:[#allocation5 + $0xc0] sm:$0xff]
    %v67 = vld [vmem:[#allocation5 + $0xc8] sm:$0xff]
    %v68 = vld [vmem:[#allocation5 + $0xd0] sm:$0xff]
    %v69 = vld [vmem:[#allocation5 + $0xd8] sm:$0xff]
    %v70 = vld [vmem:[#allocation5 + $0xe0] sm:$0xff]
    %v71 = vld [vmem:[#allocation5 + $0xe8] sm:$0xff]
    %v72 = vld [vmem:[#allocation5 + $0xf0] sm:$0xff]
    %v73 = vld [vmem:[#allocation5 + $0xf8] sm:$0xff]
    %v74 = vld [vmem:[#allocation5 + $0x100] sm:$0xff]
    %v75 = vld [vmem:[#allocation5 + $0x108] sm:$0xff]
    %v76 = vld [vmem:[#allocation5 + $0x110] sm:$0xff]
    %v77 = vld [vmem:[#allocation5 + $0x118] sm:$0xff]
    %v78 = vld [vmem:[#allocation5 + $0x120] sm:$0xff]
    %v79 = vld [vmem:[#allocation5 + $0x128] sm:$0xff]
    %v80 = vld [vmem:[#allocation5 + $0x130] sm:$0xff]
    %v81 = vld [vmem:[#allocation5 + $0x138] sm:$0xff]
    %v82 = vld [vmem:[#allocation5 + $0x140] sm:$0xff]
    %v83 = vld [vmem:[#allocation5 + $0x148] sm:$0xff]
    %v84 = vld [vmem:[#allocation5 + $0x150] sm:$0xff]
    %v85 = vld [vmem:[#allocation5 + $0x158] sm:$0xff]
    %v86 = vld [vmem:[#allocation5 + $0x160] sm:$0xff]
    %v87 = vld [vmem:[#allocation5 + $0x168] sm:$0xff]
    %v88 = vld [vmem:[#allocation5 + $0x170] sm:$0xff]
    %v89 = vld [vmem:[#allocation5 + $0x178] sm:$0xff]
    %v90 = vld [vmem:[#allocation5 + $0x180] sm:$0xff]
    %v91 = vld [vmem:[#allocation5 + $0x188] sm:$0xff]
    %v92 = vld [vmem:[#allocation5 + $0x190] sm:$0xff]
    %v93 = vld [vmem:[#allocation5 + $0x198] sm:$0xff]
    %v94 = vld [vmem:[#allocation5 + $0x1a0] sm:$0xff]
    %v95 = vld [vmem:[#allocation5 + $0x1a8] sm:$0xff]
    %v96 = vld [vmem:[#allocation5 + $0x1b0] sm:$0xff]
    %v97 = vld [vmem:[#allocation5 + $0x1b8] sm:$0xff]
    %v98 = vld [vmem:[#allocation5 + $0x1c0] sm:$0xff]
    %v99 = vld [vmem:[#allocation5 + $0x1c8] sm:$0xff]
    %v100 = vld [vmem:[#allocation5 + $0x1d0] sm:$0xff]
    %v101 = vld [vmem:[#allocation5 + $0x1d8] sm:$0xff]
    %v102 = vld [vmem:[#allocation5 + $0x1e0] sm:$0xff]
    %v103 = vld [vmem:[#allocation5 + $0x1e8] sm:$0xff]
    %v104 = vld [vmem:[#allocation5 + $0x1f0] sm:$0xff]
    %v105 = vld [vmem:[#allocation5 + $0x1f8] sm:$0xff]
    %v107 = vunpack.c.l.b16 %v41
    %v108 = vunpack.c.h.b16 %v41
    %v109 = vpack.c.b16 %v107, %v107
    %v110 = vpack.c.b16 %v108, %v108
    %v177 = vunpack.c.l.b16 %v42
    %v178 = vunpack.c.h.b16 %v42
    %v179 = vunpack.c.l.b16 %v43
    %v180 = vunpack.c.h.b16 %v43
    %v181 = vunpack.c.l.b16 %v44
    %v182 = vunpack.c.h.b16 %v44
    %v183 = vunpack.c.l.b16 %v45
    %v184 = vunpack.c.h.b16 %v45
    %v185 = vunpack.c.l.b16 %v46
    %v186 = vunpack.c.h.b16 %v46
    %v187 = vunpack.c.l.b16 %v47
    %v188 = vunpack.c.h.b16 %v47
    %v189 = vunpack.c.l.b16 %v48
    %v190 = vunpack.c.h.b16 %v48
    %v191 = vunpack.c.l.b16 %v49
    %v192 = vunpack.c.h.b16 %v49
    %v193 = vunpack.c.l.b16 %v50
    %v194 = vunpack.c.h.b16 %v50
    %v195 = vunpack.c.l.b16 %v51
    %v196 = vunpack.c.h.b16 %v51
    %v197 = vunpack.c.l.b16 %v52
    %v198 = vunpack.c.h.b16 %v52
    %v199 = vunpack.c.l.b16 %v53
    %v200 = vunpack.c.h.b16 %v53
    %v201 = vunpack.c.l.b16 %v54
    %v202 = vunpack.c.h.b16 %v54
    %v203 = vunpack.c.l.b16 %v55
    %v204 = vunpack.c.h.b16 %v55
    %v205 = vunpack.c.l.b16 %v56
    %v206 = vunpack.c.h.b16 %v56
    %v207 = vunpack.c.l.b16 %v57
    %v208 = vunpack.c.h.b16 %v57
    %v209 = vunpack.c.l.b16 %v58
    %v210 = vunpack.c.h.b16 %v58
    %v211 = vunpack.c.l.b16 %v59
    %v212 = vunpack.c.h.b16 %v59
    %v213 = vunpack.c.l.b16 %v60
    %v214 = vunpack.c.h.b16 %v60
    %v215 = vunpack.c.l.b16 %v61
    %v216 = vunpack.c.h.b16 %v61
    %v217 = vunpack.c.l.b16 %v62
    %v218 = vunpack.c.h.b16 %v62
    %v219 = vunpack.c.l.b16 %v63
    %v220 = vunpack.c.h.b16 %v63
    %v221 = vunpack.c.l.b16 %v64
    %v222 = vunpack.c.h.b16 %v64
    %v223 = vunpack.c.l.b16 %v65
    %v224 = vunpack.c.h.b16 %v65
    %v225 = vunpack.c.l.b16 %v66
    %v226 = vunpack.c.h.b16 %v66
    %v227 = vunpack.c.l.b16 %v67
    %v228 = vunpack.c.h.b16 %v67
    %v229 = vunpack.c.l.b16 %v68
    %v230 = vunpack.c.h.b16 %v68
    %v231 = vunpack.c.l.b16 %v69
    %v232 = vunpack.c.h.b16 %v69
    %v233 = vunpack.c.l.b16 %v70
    %v234 = vunpack.c.h.b16 %v70
    %v235 = vunpack.c.l.b16 %v71
    %v236 = vunpack.c.h.b16 %v71
    %v237 = vunpack.c.l.b16 %v72
    %v238 = vunpack.c.h.b16 %v72
    %v239 = vunpack.c.l.b16 %v73
    %v240 = vunpack.c.h.b16 %v73
    %v241 = vunpack.c.l.b16 %v74
    %v242 = vunpack.c.h.b16 %v74
    %v243 = vunpack.c.l.b16 %v75
    %v244 = vunpack.c.h.b16 %v75
    %v245 = vunpack.c.l.b16 %v76
    %v246 = vunpack.c.h.b16 %v76
    %v247 = vunpack.c.l.b16 %v77
    %v248 = vunpack.c.h.b16 %v77
    %v249 = vunpack.c.l.b16 %v78
    %v250 = vunpack.c.h.b16 %v78
    %v251 = vunpack.c.l.b16 %v79
    %v252 = vunpack.c.h.b16 %v79
    %v253 = vunpack.c.l.b16 %v80
    %v254 = vunpack.c.h.b16 %v80
    %v255 = vunpack.c.l.b16 %v81
    %v256 = vunpack.c.h.b16 %v81
    %v257 = vunpack.c.l.b16 %v82
    %v258 = vunpack.c.h.b16 %v82
    %v259 = vunpack.c.l.b16 %v83
    %v260 = vunpack.c.h.b16 %v83
    %v261 = vunpack.c.l.b16 %v84
    %v262 = vunpack.c.h.b16 %v84
    %v263 = vunpack.c.l.b16 %v85
    %v264 = vunpack.c.h.b16 %v85
    %v265 = vunpack.c.l.b16 %v86
    %v266 = vunpack.c.h.b16 %v86
    %v267 = vunpack.c.l.b16 %v87
    %v268 = vunpack.c.h.b16 %v87
    %v269 = vunpack.c.l.b16 %v88
    %v270 = vunpack.c.h.b16 %v88
    %v271 = vunpack.c.l.b16 %v89
    %v272 = vunpack.c.h.b16 %v89
    %v273 = vunpack.c.l.b16 %v90
    %v274 = vunpack.c.h.b16 %v90
    %v275 = vunpack.c.l.b16 %v91
    %v276 = vunpack.c.h.b16 %v91
    %v277 = vunpack.c.l.b16 %v92
    %v278 = vunpack.c.h.b16 %v92
    %v279 = vunpack.c.l.b16 %v93
    %v280 = vunpack.c.h.b16 %v93
    %v281 = vunpack.c.l.b16 %v94
    %v282 = vunpack.c.h.b16 %v94
    %v283 = vunpack.c.l.b16 %v95
    %v284 = vunpack.c.h.b16 %v95
    %v285 = vunpack.c.l.b16 %v96
    %v286 = vunpack.c.h.b16 %v96
    %v287 = vunpack.c.l.b16 %v97
    %v288 = vunpack.c.h.b16 %v97
    %v289 = vunpack.c.l.b16 %v98
    %v290 = vunpack.c.h.b16 %v98
    %v291 = vunpack.c.l.b16 %v99
    %v292 = vunpack.c.h.b16 %v99
    %v293 = vunpack.c.l.b16 %v100
    %v294 = vunpack.c.h.b16 %v100
    %v295 = vunpack.c.l.b16 %v101
    %v296 = vunpack.c.h.b16 %v101
    %v297 = vunpack.c.l.b16 %v102
    %v298 = vunpack.c.h.b16 %v102
    %v299 = vunpack.c.l.b16 %v103
    %v300 = vunpack.c.h.b16 %v103
    %v301 = vunpack.c.l.b16 %v104
    %v302 = vunpack.c.h.b16 %v104
    %v303 = vunpack.c.l.b16 %v105
    %v304 = vunpack.c.h.b16 %v105
    %v305 = vpack.c.b16 %v181, %v177
    %v306 = vpack.c.b16 %v182, %v178
    %v307 = vpack.c.b16 %v183, %v179
    %v308 = vpack.c.b16 %v184, %v180
    %v309 = vpack.c.b16 %v189, %v185
    %v310 = vpack.c.b16 %v190, %v186
    %v311 = vpack.c.b16 %v191, %v187
    %v312 = vpack.c.b16 %v192, %v188
    %v313 = vpack.c.b16 %v197, %v193
    %v314 = vpack.c.b16 %v198, %v194
    %v315 = vpack.c.b16 %v199, %v195
    %v316 = vpack.c.b16 %v200, %v196
    %v317 = vpack.c.b16 %v205, %v201
    %v318 = vpack.c.b16 %v206, %v202
    %v319 = vpack.c.b16 %v207, %v203
    %v320 = vpack.c.b16 %v208, %v204
    %v321 = vpack.c.b16 %v213, %v209
    %v322 = vpack.c.b16 %v214, %v210
    %v323 = vpack.c.b16 %v215, %v211
    %v324 = vpack.c.b16 %v216, %v212
    %v325 = vpack.c.b16 %v221, %v217
    %v326 = vpack.c.b16 %v222, %v218
    %v327 = vpack.c.b16 %v223, %v219
    %v328 = vpack.c.b16 %v224, %v220
    %v329 = vpack.c.b16 %v229, %v225
    %v330 = vpack.c.b16 %v230, %v226
    %v331 = vpack.c.b16 %v231, %v227
    %v332 = vpack.c.b16 %v232, %v228
    %v333 = vpack.c.b16 %v237, %v233
    %v334 = vpack.c.b16 %v238, %v234
    %v335 = vpack.c.b16 %v239, %v235
    %v336 = vpack.c.b16 %v240, %v236
    %v337 = vpack.c.b16 %v245, %v241
    %v338 = vpack.c.b16 %v246, %v242
    %v339 = vpack.c.b16 %v247, %v243
    %v340 = vpack.c.b16 %v248, %v244
    %v341 = vpack.c.b16 %v253, %v249
    %v342 = vpack.c.b16 %v254, %v250
    %v343 = vpack.c.b16 %v255, %v251
    %v344 = vpack.c.b16 %v256, %v252
    %v345 = vpack.c.b16 %v261, %v257
    %v346 = vpack.c.b16 %v262, %v258
    %v347 = vpack.c.b16 %v263, %v259
    %v348 = vpack.c.b16 %v264, %v260
    %v349 = vpack.c.b16 %v269, %v265
    %v350 = vpack.c.b16 %v270, %v266
    %v351 = vpack.c.b16 %v271, %v267
    %v352 = vpack.c.b16 %v272, %v268
    %v353 = vpack.c.b16 %v277, %v273
    %v354 = vpack.c.b16 %v278, %v274
    %v355 = vpack.c.b16 %v279, %v275
    %v356 = vpack.c.b16 %v280, %v276
    %v357 = vpack.c.b16 %v285, %v281
    %v358 = vpack.c.b16 %v286, %v282
    %v359 = vpack.c.b16 %v287, %v283
    %v360 = vpack.c.b16 %v288, %v284
    %v361 = vpack.c.b16 %v293, %v289
    %v362 = vpack.c.b16 %v294, %v290
    %v363 = vpack.c.b16 %v295, %v291
    %v364 = vpack.c.b16 %v296, %v292
    %v365 = vpack.c.b16 %v301, %v297
    %v366 = vpack.c.b16 %v302, %v298
    %v367 = vpack.c.b16 %v303, %v299
    %v368 = vpack.c.b16 %v304, %v300
    %433 = vmatprep.subr.bf16.mxu0 %v306
    %434 = vmatpush1.bf16.msra.mxu0 %v305
    %435 = vmatprep.subr.bf16.mxu0 %v310
    %436 = vmatpush1.bf16.msra.mxu0 %v309
    %437 = vmatprep.subr.bf16.mxu0 %v314
    %438 = vmatpush1.bf16.msra.mxu0 %v313
    %439 = vmatprep.subr.bf16.mxu0 %v318
    %440 = vmatpush1.bf16.msra.mxu0 %v317
    %441 = vmatprep.subr.bf16.mxu0 %v322
    %442 = vmatpush1.bf16.msra.mxu0 %v321
    %443 = vmatprep.subr.bf16.mxu0 %v326
    %444 = vmatpush1.bf16.msra.mxu0 %v325
    %445 = vmatprep.subr.bf16.mxu0 %v330
    %446 = vmatpush1.bf16.msra.mxu0 %v329
    %447 = vmatprep.subr.bf16.mxu0 %v334
    %448 = vmatpush1.bf16.msra.mxu0 %v333
    %449 = vmatprep.subr.bf16.mxu0 %v338
    %450 = vmatpush1.bf16.msra.mxu0 %v337
    %451 = vmatprep.subr.bf16.mxu0 %v342
    %452 = vmatpush1.bf16.msra.mxu0 %v341
    %453 = vmatprep.subr.bf16.mxu0 %v346
    %454 = vmatpush1.bf16.msra.mxu0 %v345
    %455 = vmatprep.subr.bf16.mxu0 %v350
    %456 = vmatpush1.bf16.msra.mxu0 %v349
    %457 = vmatprep.subr.bf16.mxu0 %v354
    %458 = vmatpush1.bf16.msra.mxu0 %v353
    %459 = vmatprep.subr.bf16.mxu0 %v358
    %460 = vmatpush1.bf16.msra.mxu0 %v357
    %461 = vmatprep.subr.bf16.mxu0 %v362
    %462 = vmatpush1.bf16.msra.mxu0 %v361
    %463 = vmatprep.subr.bf16.mxu0 %v366
    %464 = vmatpush1.bf16.msra.mxu0 %v365
    %465 = vmatprep.mubr.bf16.mxu0 %v110
    %466 = vmatmul.mubr.bf16.gmra.mrb[0].mxu0 %v109
    %v467 = vpop.f32.mrb[0].mxu0
    %v468 = vadd.f32 0.0, %v467
    %v469 = vpop.f32.mrb[0].mxu0
    %v470 = vadd.f32 0.0, %v469
    %v471 = vpop.f32.mrb[0].mxu0
    %v472 = vpop.f32.mrb[0].mxu0
    %473 = vdwg.mxu0
    %474 = vmatprep.subr.bf16.mxu0 %v308
    %475 = vmatpush1.bf16.msra.mxu0 %v307
    %476 = vmatprep.subr.bf16.mxu0 %v312
    %477 = vmatpush1.bf16.msra.mxu0 %v311
    %478 = vmatprep.subr.bf16.mxu0 %v316
    %479 = vmatpush1.bf16.msra.mxu0 %v315
    %480 = vmatprep.subr.bf16.mxu0 %v320
    %481 = vmatpush1.bf16.msra.mxu0 %v319
    %482 = vmatprep.subr.bf16.mxu0 %v324
    %483 = vmatpush1.bf16.msra.mxu0 %v323
    %484 = vmatprep.subr.bf16.mxu0 %v328
    %485 = vmatpush1.bf16.msra.mxu0 %v327
    %486 = vmatprep.subr.bf16.mxu0 %v332
    %487 = vmatpush1.bf16.msra.mxu0 %v331
    %488 = vmatprep.subr.bf16.mxu0 %v336
    %489 = vmatpush1.bf16.msra.mxu0 %v335
    %490 = vmatprep.subr.bf16.mxu0 %v340
    %491 = vmatpush1.bf16.msra.mxu0 %v339
    %492 = vmatprep.subr.bf16.mxu0 %v344
    %493 = vmatpush1.bf16.msra.mxu0 %v343
    %494 = vmatprep.subr.bf16.mxu0 %v348
    %495 = vmatpush1.bf16.msra.mxu0 %v347
    %496 = vmatprep.subr.bf16.mxu0 %v352
    %497 = vmatpush1.bf16.msra.mxu0 %v351
    %498 = vmatprep.subr.bf16.mxu0 %v356
    %499 = vmatpush1.bf16.msra.mxu0 %v355
    %500 = vmatprep.subr.bf16.mxu0 %v360
    %501 = vmatpush1.bf16.msra.mxu0 %v359
    %502 = vmatprep.subr.bf16.mxu0 %v364
    %503 = vmatpush1.bf16.msra.mxu0 %v363
    %504 = vmatprep.subr.bf16.mxu0 %v368
    %505 = vmatpush1.bf16.msra.mxu0 %v367
    %506 = vmatprep.mubr.bf16.mxu0 %v110
    %507 = vmatmul.mubr.bf16.gmra.mrb[0].mxu0 %v109
    %v508 = vpop.f32.mrb[0].mxu0
    %v509 = vadd.f32 0.0, %v508
    %v510 = vpop.f32.mrb[0].mxu0
    %v511 = vadd.f32 0.0, %v510
    %v512 = vpop.f32.mrb[0].mxu0
    %v513 = vpop.f32.mrb[0].mxu0
    %514 = vdwg.mxu0
    %v515 = vmul.f32 %v468, %v468
    %v516 = vmul.f32 %v470, %v470
    %v517 = vmul.f32 %v509, %v509
    %v518 = vmul.f32 %v511, %v511
    %v519 = vadd.f32 %v515, %v517
    %v520 = vadd.f32 %v516, %v518
    %v521 = vrsqrt.pop %v519
    %v522 = vmul.f32 %v519, %v521
    %vm523 = vcmp.eq.f32.partialorder %v519, inf
    %v524 = vsel %vm523, %v519, %v522
    %vm525 = vcmp.eq.f32.partialorder %v519, 0.0
    %v526 = vand.u32 %v519, 2147483648
    %v527 = vsel %vm525, %v526, %v524
    %v528 = vrsqrt.pop %v520
    %v529 = vmul.f32 %v520, %v528
    %vm530 = vcmp.eq.f32.partialorder %v520, inf
    %v531 = vsel %vm530, %v520, %v529
    %vm532 = vcmp.eq.f32.partialorder %v520, 0.0
    %v533 = vand.u32 %v520, 2147483648
    %v534 = vsel %vm532, %v533, %v531
    %535 = vst [vmem:[#allocation7] sm:$0xff] %v527
    %536 = vst [vmem:[#allocation7 + $0x8] sm:$0xff] %v534
    %vm537 = vcmp.eq.f32.partialorder %v468, 0.0
    %vm538 = vcmp.eq.f32.partialorder %v470, 0.0
    %v539 = vsel %vm537, 1.0, %v468
    %v540 = vsel %vm538, 1.0, %v470
    %v541 = vrcp.pop %v539
    %v542 = vrcp.pop %v540
    %v543 = vmul.f32 %v509, %v541
    %v544 = vmul.f32 %v511, %v542
    %v545 = vand.u32 2147483647, %v543
    %v546 = vand.u32 2147483647, %v544
    %vm547 = vcmp.gt.f32.partialorder %v545, 2.4142137
    %vm548 = vcmp.gt.f32.partialorder %v546, 2.4142137
    %vm549 = vcmp.gt.f32.partialorder %v545, 0.41421357
    %vm550 = vcmp.gt.f32.partialorder %v546, 0.41421357
    %v551 = vmax.f32 %v545, 1e-30
    %v552 = vmax.f32 %v546, 1e-30
    %v553 = vrcp.pop %v551
    %v554 = vrcp.pop %v552
    %v555 = vadd.f32 %v545, 1.0
    %v556 = vadd.f32 %v546, 1.0
    %v557 = vrcp.pop %v555
    %v558 = vrcp.pop %v556
    %v559 = vsub.f32 0.0, %v553
    %v560 = vsub.f32 0.0, %v554
    %v561 = vsub.f32 %v545, 1.0
    %v562 = vsub.f32 %v546, 1.0
    %v563 = vmul.f32 %v561, %v557
    %v564 = vmul.f32 %v562, %v558
    %v565 = vsel %vm549, %v563, %v545
    %v566 = vsel %vm550, %v564, %v546
    %v567 = vsel %vm547, %v559, %v565
    %v568 = vsel %vm548, %v560, %v566
    %v569 = vsel %vm549, 0.7853982, 0.0
    %v570 = vsel %vm550, 0.7853982, 0.0
    %v571 = vsel %vm547, 1.5707964, %v569
    %v572 = vsel %vm548, 1.5707964, %v570
    %v573 = vmul.f32 %v567, %v567
    %v574 = vmul.f32 %v568, %v568
    %v575 = vmul.f32 %v573, 0.080537446
    %v576 = vmul.f32 %v574, 0.080537446
    %v577 = vsub.f32 %v575, 0.13877685
    %v578 = vsub.f32 %v576, 0.13877685
    %v579 = vmul.f32 %v577, %v573
    %v580 = vmul.f32 %v578, %v574
    %v581 = vadd.f32 %v579, 0.19977711
    %v582 = vadd.f32 %v580, 0.19977711
    %v583 = vmul.f32 %v581, %v573
    %v584 = vmul.f32 %v582, %v574
    %v585 = vsub.f32 %v583, 0.3333295
    %v586 = vsub.f32 %v584, 0.3333295
    %v587 = vmul.f32 %v585, %v573
    %v588 = vmul.f32 %v586, %v574
    %v589 = vmul.f32 %v587, %v567
    %v590 = vmul.f32 %v588, %v568
    %v591 = vadd.f32 %v589, %v567
    %v592 = vadd.f32 %v590, %v568
    %v593 = vadd.f32 %v571, %v591
    %v594 = vadd.f32 %v572, %v592
    %vm595 = vcmp.ge.f32.partialorder %v543, 0.0
    %vm596 = vcmp.ge.f32.partialorder %v544, 0.0
    %v597 = vsub.f32 0.0, %v593
    %v598 = vsub.f32 0.0, %v594
    %v599 = vsel %vm595, %v593, %v597
    %v600 = vsel %vm596, %v594, %v598
    %vm601 = vcmp.gt.f32.partialorder %v468, 0.0
    %vm602 = vcmp.gt.f32.partialorder %v470, 0.0
    %vm603 = vcmp.lt.f32.partialorder %v468, 0.0
    %vm604 = vcmp.lt.f32.partialorder %v470, 0.0
    %vm605 = vcmp.ge.f32.partialorder %v509, 0.0
    %vm606 = vcmp.ge.f32.partialorder %v511, 0.0
    %v607 = vadd.f32 %v599, 3.1415927
    %v608 = vadd.f32 %v600, 3.1415927
    %v609 = vsub.f32 %v599, 3.1415927
    %v610 = vsub.f32 %v600, 3.1415927
    %v611 = vsel %vm605, %v607, %v609
    %v612 = vsel %vm606, %v608, %v610
    %vm613 = vcmp.gt.f32.partialorder %v509, 0.0
    %vm614 = vcmp.gt.f32.partialorder %v511, 0.0
    %vm615 = vcmp.lt.f32.partialorder %v509, 0.0
    %vm616 = vcmp.lt.f32.partialorder %v511, 0.0
    %v617 = vsel %vm615, -1.5707964, 0.0
    %v618 = vsel %vm616, -1.5707964, 0.0
    %v619 = vsel %vm613, 1.5707964, %v617
    %v620 = vsel %vm614, 1.5707964, %v618
    %v621 = vsel %vm603, %v611, %v619
    %v622 = vsel %vm604, %v612, %v620
    %v623 = vsel %vm601, %v599, %v621
    %v624 = vsel %vm602, %v600, %v622
    %625 = vst [vmem:[#allocation8] sm:$0xff] %v623
    %626 = vst [vmem:[#allocation8 + $0x8] sm:$0xff] %v624
    // Predicated region
    $region18: #{tpu_custom_call.1} parent=1 // pred_check
      _
    $region19: #{tpu_custom_call.1} parent=1 // pred_check_branch
      %628 = sbr.rel (0) target = $region21
    $region20: #{tpu_custom_call.1} parent=1 // pred_region
      %s630 = ssub.s32 256, 256
      %631 = vsyncadd [#allocation4], %s630
      %s633 = sshll.u32 [#allocation7], 4
      %s634 = int_to_ptr.vmem [resolvable:$true] %s633
      %636 = dma.vmem_to_hbm [thread:$0]  %s634, 256, %s2, [#allocation4]
    $region21: #{tpu_custom_call.1} parent=1 // pred_fallthru
      _
    // Predicated region
    $region22: #{tpu_custom_call.1} parent=1 // pred_check
      _
    $region23: #{tpu_custom_call.1} parent=1 // pred_check_branch
      %638 = sbr.rel (0) target = $region25
    $region24: #{tpu_custom_call.1} parent=1 // pred_region
      %s640 = ssub.s32 256, 256
      %641 = vsyncadd [#allocation9], %s640
      %s643 = sshll.u32 [#allocation8], 4
      %s644 = int_to_ptr.vmem [resolvable:$true] %s643
      %646 = dma.vmem_to_hbm [thread:$0]  %s644, 256, %s3, [#allocation9]
    $region25: #{tpu_custom_call.1} parent=1 // pred_fallthru
      _
    // Predicated region
    $region26: #{tpu_custom_call.1} parent=1 // pred_check
      _
    $region27: #{tpu_custom_call.1} parent=1 // pred_check_branch
      %648 = sbr.rel (0) target = $region29
    $region28: #{tpu_custom_call.1} parent=1 // pred_region
      %649 = dma.done [#allocation4], 256
    $region29: #{tpu_custom_call.1} parent=1 // pred_fallthru
      _
    // Predicated region
    $region30: #{tpu_custom_call.1} parent=1 // pred_check
      _
    $region31: #{tpu_custom_call.1} parent=1 // pred_check_branch
      %651 = sbr.rel (0) target = $region33
    $region32: #{tpu_custom_call.1} parent=1 // pred_region
      %652 = dma.done [#allocation9], 256
    $region33: #{tpu_custom_call.1} parent=1 // pred_fallthru
      _
    %653 = vsyncpa [#allocation3], 1
    %654 = vsyncpa [#allocation6], 1
    %655 = vsyncpa [#allocation4], 1
    %656 = vsyncpa [#allocation9], 1

</llo_original>
